<compile_context>
chip_gen: v7x
topology: tpu7x:2x2x1
jax: 0.10.0
libtpu: 0.0.40
codegen_flags: <defaults>
</compile_context>

<pallas_src>
import jax
import jax.numpy as jnp
from jax import lax
from jax.experimental import pallas as pl
from jax.experimental.pallas import tpu as pltpu


# ----------------------------------------------------------------------------
# Pallas kernel: the whole SCBlock forward, fused.
# ----------------------------------------------------------------------------
def scblock_kernel(x_ref, w1_ref, b1_ref, w2_ref, b2_ref, o_ref):
    """x_ref : (N*HW, C)  channels-last input rows
       w1_ref: (C, mid)   linear1 weight (transposed)
       b1_ref: (1, mid)   linear1 bias
       w2_ref: (1, mid)   linear2 weight (row vector)
       b2_ref: (1, 1)     linear2 bias
       o_ref : (N, 1)     output
    """
    nhw, _ = x_ref.shape
    n = o_ref.shape[0]
    hw = nhw // n

    # --- Global average pool as a lane-dense MXU matmul -----------------
    # pool[b, j] = 1/HW  if row j belongs to batch element b, else 0.
    row = lax.broadcasted_iota(jnp.int32, (n, nhw), 0)
    col = lax.broadcasted_iota(jnp.int32, (n, nhw), 1)
    lo = row * hw
    mask = (col >= lo) & (col < lo + hw)
    pool = jnp.where(mask, jnp.float32(1.0 / hw), jnp.float32(0.0))
    pooled = jnp.dot(pool, x_ref[...], preferred_element_type=jnp.float32)  # (N, C)

    # --- linear1 + ReLU (MXU, default precision, f32 accumulation) ------
    h = jnp.dot(pooled, w1_ref[...], preferred_element_type=jnp.float32) + b1_ref[...]
    h = jnp.maximum(h, 0.0)                                                  # (N, mid)

    # --- linear2 (single output unit): VPU multiply + lane reduction ----
    out = jnp.sum(h * w2_ref[...], axis=1, keepdims=True) + b2_ref[...]      # (N, 1)
    o_ref[...] = out


# ----------------------------------------------------------------------------
# Wrapper
# ----------------------------------------------------------------------------
@jax.jit
def scblock_forward(x, w1, b1, w2, b2):
    """x: (N, C, H, W) NCHW; w1: (mid, C); b1: (mid,); w2: (1, mid); b2: (1,)."""
    n, c, h, w = x.shape
    mid = w1.shape[0]

    # channels-last rows: (N*H*W, C); C = 256 keeps the lane axis dense.
    x_rows = jnp.transpose(x, (0, 2, 3, 1)).reshape(n * h * w, c).astype(jnp.float32)
    w1_t = jnp.transpose(w1, (1, 0)).astype(jnp.float32)   # (C, mid)
    b1_r = b1.reshape(1, mid).astype(jnp.float32)
    w2_r = w2.reshape(1, mid).astype(jnp.float32)
    b2_r = b2.reshape(1, 1).astype(jnp.float32)

    return pl.pallas_call(
        scblock_kernel,
        out_shape=jax.ShapeDtypeStruct((n, 1), jnp.float32),
        in_specs=[
            pl.BlockSpec(memory_space=pltpu.MemorySpace.VMEM),  # x rows
            pl.BlockSpec(memory_space=pltpu.MemorySpace.VMEM),  # w1^T
            pl.BlockSpec(memory_space=pltpu.MemorySpace.VMEM),  # b1
            pl.BlockSpec(memory_space=pltpu.MemorySpace.VMEM),  # w2
            pl.BlockSpec(memory_space=pltpu.MemorySpace.VMEM),  # b2
        ],
        out_specs=pl.BlockSpec(memory_space=pltpu.MemorySpace.VMEM),
    )(x_rows, w1_t, b1_r, w2_r, b2_r)


# ----------------------------------------------------------------------------
# Pure-JAX reference (for verification)
# ----------------------------------------------------------------------------
def reference_forward(x, w1, b1, w2, b2):
    pooled = jnp.mean(x, axis=(2, 3))                # AdaptiveAvgPool2d((1,1)) + Flatten
    h = jnp.maximum(pooled @ w1.T + b1, 0.0)         # linear1 + ReLU
    return h @ w2.T + b2                             # linear2


# ----------------------------------------------------------------------------
# Main
# ----------------------------------------------------------------------------
if __name__ == "__main__":
    N, C, H, W = 2, 256, 8, 8        # Linear(256, mid) forces C = 256
    MID = 256                        # SCBlock default mid_channels

    key = jax.random.PRNGKey(0)
    kx, kw1, kb1, kw2, kb2 = jax.random.split(key, 5)

    x = jax.random.normal(kx, (N, C, H, W), jnp.float32)
    w1 = jax.random.normal(kw1, (MID, C), jnp.float32) * 0.05
    b1 = jax.random.normal(kb1, (MID,), jnp.float32) * 0.05
    w2 = jax.random.normal(kw2, (1, MID), jnp.float32) * 0.05
    b2 = jax.random.normal(kb2, (1,), jnp.float32) * 0.05

    out = scblock_forward(x, w1, b1, w2, b2)
    out = jax.block_until_ready(out)

    ref = reference_forward(x, w1, b1, w2, b2)
    ref = jax.block_until_ready(ref)

    assert out.shape == (N, 1), out.shape
    max_err = float(jnp.max(jnp.abs(out - ref)))
    assert jnp.allclose(out, ref, atol=1e-2, rtol=1e-2), max_err

    print("KERNEL_OK")
</pallas_src>

<mosaic_0001>
module attributes {stable_mosaic.version = 11 : i64} {
  func.func @scblock_kernel(%arg0: memref<128x256xf32, #tpu.memory_space<vmem>>, %arg1: memref<256x256xf32, #tpu.memory_space<vmem>>, %arg2: memref<1x256xf32, #tpu.memory_space<vmem>>, %arg3: memref<1x256xf32, #tpu.memory_space<vmem>>, %arg4: memref<1x1xf32, #tpu.memory_space<vmem>>, %arg5: memref<2x1xf32, #tpu.memory_space<vmem>>) attributes {dimension_semantics = [], scalar_prefetch = 0 : i64, scratch_operands = 0 : i64, tpu.core_type = #tpu.core_type<tc>} {
    %0 = tpu.iota {dimensions = array<i32: 0>} : vector<2x128xi32>
    %1 = tpu.iota {dimensions = array<i32: 1>} : vector<2x128xi32>
    %c64_i32 = arith.constant 64 : i32
    %2 = vector.broadcast %c64_i32 : i32 to vector<2x128xi32>
    %3 = arith.muli %0, %2 : vector<2x128xi32>
    %4 = arith.cmpi sge, %1, %3 : vector<2x128xi32>
    %c64_i32_0 = arith.constant 64 : i32
    %5 = vector.broadcast %c64_i32_0 : i32 to vector<2x128xi32>
    %6 = arith.addi %3, %5 : vector<2x128xi32>
    %7 = arith.cmpi slt, %1, %6 : vector<2x128xi32>
    %8 = arith.andi %4, %7 : vector<2x128xi1>
    %cst = arith.constant 1.562500e-02 : f32
    %cst_1 = arith.constant 0.000000e+00 : f32
    %9 = vector.broadcast %cst : f32 to vector<2x128xf32>
    %10 = vector.broadcast %cst_1 : f32 to vector<2x128xf32>
    %11 = arith.select %8, %9, %10 : vector<2x128xi1>, vector<2x128xf32>
    %c0 = arith.constant 0 : index
    %c0_2 = arith.constant 0 : index
    %12 = vector.load %arg0[%c0, %c0_2] : memref<128x256xf32, #tpu.memory_space<vmem>>, vector<128x256xf32>
    %cst_3 = arith.constant dense<0.000000e+00> : vector<2x256xf32>
    %13 = tpu.matmul %11, %12, %cst_3 {dimension_numbers = #tpu.dot_dimension_numbers<[1], [0], [0], [1], [0, 0, 1, 1], [], []>} : vector<2x128xf32>, vector<128x256xf32>, vector<2x256xf32> -> vector<2x256xf32>
    %c0_4 = arith.constant 0 : index
    %c0_5 = arith.constant 0 : index
    %14 = vector.load %arg1[%c0_4, %c0_5] : memref<256x256xf32, #tpu.memory_space<vmem>>, vector<256x256xf32>
    %cst_6 = arith.constant dense<0.000000e+00> : vector<2x256xf32>
    %15 = tpu.matmul %13, %14, %cst_6 {dimension_numbers = #tpu.dot_dimension_numbers<[1], [0], [0], [1], [0, 0, 1, 1], [], []>} : vector<2x256xf32>, vector<256x256xf32>, vector<2x256xf32> -> vector<2x256xf32>
    %c0_7 = arith.constant 0 : index
    %c0_8 = arith.constant 0 : index
    %16 = vector.load %arg2[%c0_7, %c0_8] : memref<1x256xf32, #tpu.memory_space<vmem>>, vector<1x256xf32>
    %17 = vector.broadcast %16 : vector<1x256xf32> to vector<2x256xf32>
    %18 = arith.addf %15, %17 : vector<2x256xf32>
    %cst_9 = arith.constant 0.000000e+00 : f32
    %19 = vector.broadcast %cst_9 : f32 to vector<2x256xf32>
    %20 = arith.maximumf %18, %19 : vector<2x256xf32>
    %c0_10 = arith.constant 0 : index
    %c0_11 = arith.constant 0 : index
    %21 = vector.load %arg3[%c0_10, %c0_11] : memref<1x256xf32, #tpu.memory_space<vmem>>, vector<1x256xf32>
    %22 = vector.broadcast %21 : vector<1x256xf32> to vector<2x256xf32>
    %23 = arith.mulf %20, %22 : vector<2x256xf32>
    %cst_12 = arith.constant dense<0.000000e+00> : vector<2xf32>
    %24 = vector.multi_reduction <add>, %23, %cst_12 [1] : vector<2x256xf32> to vector<2xf32>
    %25 = vector.shape_cast %24 : vector<2xf32> to vector<2x1xf32>
    %c0_13 = arith.constant 0 : index
    %c0_14 = arith.constant 0 : index
    %26 = vector.load %arg4[%c0_13, %c0_14] : memref<1x1xf32, #tpu.memory_space<vmem>>, vector<1x1xf32>
    %27 = vector.broadcast %26 : vector<1x1xf32> to vector<2x1xf32>
    %28 = arith.addf %25, %27 : vector<2x1xf32>
    %c0_15 = arith.constant 0 : index
    %c0_16 = arith.constant 0 : index
    %29 = vector.load %arg5[%c0_15, %c0_16] : memref<2x1xf32, #tpu.memory_space<vmem>>, vector<2x1xf32>
    tpu.vector_store %arg5[%c0_15, %c0_16], %28 {strides = array<i32>} : memref<2x1xf32, #tpu.memory_space<vmem>>, vector<2x1xf32>,
    return
  }
}

</mosaic_0001>

<llo_original>
// kernel: scblock_forward.1
$region0: #{scblock_forward.1}
  #allocation0 [shape = 'u32[]', space=smem, size = 0x4, offset = 0x4, fixed_abs, tag = 'smem constant byte address 0x4 - core index']
  #allocation1 [shape = 'u32[144,128]{1,0:T(1,128)}', space=vmem, size = 0x12000, scoped, tag = 'internal scratch']
  #allocation2 [shape = 'f32[1,1]{1,0:T(1,128)S(1)}', space=vmem, size = 0x200, scoped, tag = 'scoped memory for scblock_forward.1']
  %s0 = inlined_call_operand.vmem [shape: f32[128,256], index: 0, kind: input, shape index: {}]
  %s1 = inlined_call_operand.vmem [shape: f32[256,256], index: 1, kind: input, shape index: {}]
  %s2 = inlined_call_operand.vmem [shape: f32[1,256], index: 2, kind: input, shape index: {}]
  %s3 = inlined_call_operand.vmem [shape: f32[1,256], index: 3, kind: input, shape index: {}]
  %s4 = inlined_call_operand.<no memory space> [shape: f32[1,1], index: 4, kind: input, shape index: {}]
  %s5 = inlined_call_operand.vmem [shape: f32[2,1], index: 5, kind: output, shape index: {}]
  %s6 = sld [smem:[#allocation0]]
  $region30: #{scblock_forward.1} parent=0
    _
  %s8 = ssub.s32 1, %s6
  %s9 = scalar_select 0, %s8, %s6
  %v10 = vstv %s4
  %11 = vst [vmem:[#allocation2] sm:$0x1] %v10
  // Predicated region
  $region2: #{scblock_forward.1} parent=0 // pred_check
    _
  $region3: #{scblock_forward.1} parent=0 // pred_check_branch
    %13 = sbr.rel (0) target = $region5
  $region4: #{scblock_forward.1} parent=0 // pred_region
    _
  $region5: #{scblock_forward.1} parent=0 // pred_fallthru
    _
  // Predicated region
  $region6: #{scblock_forward.1} parent=0 // pred_check
    _
  $region7: #{scblock_forward.1} parent=0 // pred_check_branch
    %15 = sbr.rel (0) target = $region9
  $region8: #{scblock_forward.1} parent=0 // pred_region
    _
  $region9: #{scblock_forward.1} parent=0 // pred_fallthru
    _
  // Predicated region
  $region10: #{scblock_forward.1} parent=0 // pred_check
    _
  $region11: #{scblock_forward.1} parent=0 // pred_check_branch
    %17 = sbr.rel (0) target = $region13
  $region12: #{scblock_forward.1} parent=0 // pred_region
    _
  $region13: #{scblock_forward.1} parent=0 // pred_fallthru
    _
  // Predicated region
  $region14: #{scblock_forward.1} parent=0 // pred_check
    _
  $region15: #{scblock_forward.1} parent=0 // pred_check_branch
    %19 = sbr.rel (0) target = $region17
  $region16: #{scblock_forward.1} parent=0 // pred_region
    _
  $region17: #{scblock_forward.1} parent=0 // pred_fallthru
    _
  // Predicated region
  $region18: #{scblock_forward.1} parent=0 // pred_check
    _
  $region19: #{scblock_forward.1} parent=0 // pred_check_branch
    %21 = sbr.rel (0) target = $region21
  $region20: #{scblock_forward.1} parent=0 // pred_region
    _
  $region21: #{scblock_forward.1} parent=0 // pred_fallthru
    _
  %v22 = vlaneseq
  %v23 = vshrl.u32 %v22, 7
  %v24 = vlaneseq
  %v25 = vand.u32 %v24, 127
  %v26 = vmul.u32 %v23, 64
  %vm27 = vcmp.ge.s32.totalorder %v25, %v26
  %v28 = vadd.s32 %v26, 64
  %vm29 = vcmp.lt.s32.totalorder %v25, %v28
  %vm30 = vmand %vm27, %vm29
  %v31 = vsel %vm30, 0.015625, 0.0
  %v32 = vld [vmem:[%s0] sm:$0xff]
  %v33 = vld [vmem:[%s0 + $0x8] sm:$0xff]
  %v34 = vld [vmem:[%s0 + $0x10] sm:$0xff]
  %v35 = vld [vmem:[%s0 + $0x18] sm:$0xff]
  %v36 = vld [vmem:[%s0 + $0x20] sm:$0xff]
  %v37 = vld [vmem:[%s0 + $0x28] sm:$0xff]
  %v38 = vld [vmem:[%s0 + $0x30] sm:$0xff]
  %v39 = vld [vmem:[%s0 + $0x38] sm:$0xff]
  %v40 = vld [vmem:[%s0 + $0x40] sm:$0xff]
  %v41 = vld [vmem:[%s0 + $0x48] sm:$0xff]
  %v42 = vld [vmem:[%s0 + $0x50] sm:$0xff]
  %v43 = vld [vmem:[%s0 + $0x58] sm:$0xff]
  %v44 = vld [vmem:[%s0 + $0x60] sm:$0xff]
  %v45 = vld [vmem:[%s0 + $0x68] sm:$0xff]
  %v46 = vld [vmem:[%s0 + $0x70] sm:$0xff]
  %v47 = vld [vmem:[%s0 + $0x78] sm:$0xff]
  %v48 = vld [vmem:[%s0 + $0x80] sm:$0xff]
  %v49 = vld [vmem:[%s0 + $0x88] sm:$0xff]
  %v50 = vld [vmem:[%s0 + $0x90] sm:$0xff]
  %v51 = vld [vmem:[%s0 + $0x98] sm:$0xff]
  %v52 = vld [vmem:[%s0 + $0xa0] sm:$0xff]
  %v53 = vld [vmem:[%s0 + $0xa8] sm:$0xff]
  %v54 = vld [vmem:[%s0 + $0xb0] sm:$0xff]
  %v55 = vld [vmem:[%s0 + $0xb8] sm:$0xff]
  %v56 = vld [vmem:[%s0 + $0xc0] sm:$0xff]
  %v57 = vld [vmem:[%s0 + $0xc8] sm:$0xff]
  %v58 = vld [vmem:[%s0 + $0xd0] sm:$0xff]
  %v59 = vld [vmem:[%s0 + $0xd8] sm:$0xff]
  %v60 = vld [vmem:[%s0 + $0xe0] sm:$0xff]
  %v61 = vld [vmem:[%s0 + $0xe8] sm:$0xff]
  %v62 = vld [vmem:[%s0 + $0xf0] sm:$0xff]
  %v63 = vld [vmem:[%s0 + $0xf8] sm:$0xff]
  %64 = vmatprep.subr.mxu0 %v33
  %65 = vmatpush1.msra.mxu0 %v32
  %66 = vmatprep.subr.mxu0 %v35
  %67 = vmatpush1.msra.mxu0 %v34
  %68 = vmatprep.subr.mxu0 %v37
  %69 = vmatpush1.msra.mxu0 %v36
  %70 = vmatprep.subr.mxu0 %v39
  %71 = vmatpush1.msra.mxu0 %v38
  %72 = vmatprep.subr.mxu0 %v41
  %73 = vmatpush1.msra.mxu0 %v40
  %74 = vmatprep.subr.mxu0 %v43
  %75 = vmatpush1.msra.mxu0 %v42
  %76 = vmatprep.subr.mxu0 %v45
  %77 = vmatpush1.msra.mxu0 %v44
  %78 = vmatprep.subr.mxu0 %v47
  %79 = vmatpush1.msra.mxu0 %v46
  %80 = vmatprep.subr.mxu0 %v49
  %81 = vmatpush1.msra.mxu0 %v48
  %82 = vmatprep.subr.mxu0 %v51
  %83 = vmatpush1.msra.mxu0 %v50
  %84 = vmatprep.subr.mxu0 %v53
  %85 = vmatpush1.msra.mxu0 %v52
  %86 = vmatprep.subr.mxu0 %v55
  %87 = vmatpush1.msra.mxu0 %v54
  %88 = vmatprep.subr.mxu0 %v57
  %89 = vmatpush1.msra.mxu0 %v56
  %90 = vmatprep.subr.mxu0 %v59
  %91 = vmatpush1.msra.mxu0 %v58
  %92 = vmatprep.subr.mxu0 %v61
  %93 = vmatpush1.msra.mxu0 %v60
  %94 = vmatprep.subr.mxu0 %v63
  %95 = vmatpush1.msra.mxu0 %v62
  %96 = vmatprep.subr.mxu0 0.0
  %97 = vmatpush1.msra.mxu0 0.0
  %98 = vmatprep.subr.mxu0 0.0
  %99 = vmatpush1.msra.mxu0 0.0
  %100 = vmatprep.subr.mxu0 0.0
  %101 = vmatpush1.msra.mxu0 0.0
  %102 = vmatprep.subr.mxu0 0.0
  %103 = vmatpush1.msra.mxu0 0.0
  %104 = vmatprep.subr.mxu0 0.0
  %105 = vmatpush1.msra.mxu0 0.0
  %106 = vmatprep.subr.mxu0 0.0
  %107 = vmatpush1.msra.mxu0 0.0
  %108 = vmatprep.subr.mxu0 0.0
  %109 = vmatpush1.msra.mxu0 0.0
  %110 = vmatprep.subr.mxu0 0.0
  %111 = vmatpush1.msra.mxu0 0.0
  %112 = vmatprep.subr.mxu0 0.0
  %113 = vmatpush1.msra.mxu0 0.0
  %114 = vmatprep.subr.mxu0 0.0
  %115 = vmatpush1.msra.mxu0 0.0
  %116 = vmatprep.subr.mxu0 0.0
  %117 = vmatpush1.msra.mxu0 0.0
  %118 = vmatprep.subr.mxu0 0.0
  %119 = vmatpush1.msra.mxu0 0.0
  %120 = vmatprep.subr.mxu0 0.0
  %121 = vmatpush1.msra.mxu0 0.0
  %122 = vmatprep.subr.mxu0 0.0
  %123 = vmatpush1.msra.mxu0 0.0
  %124 = vmatprep.subr.mxu0 0.0
  %125 = vmatpush1.msra.mxu0 0.0
  %126 = vmatprep.subr.mxu0 0.0
  %127 = vmatpush1.msra.mxu0 0.0
  %128 = vmatprep.mubr.f32.mxu0 0.0
  %129 = vmatmul.mubr.f32.gmra.mrb[0].mxu0 %v31
  %v130 = vpop.f32.mrb[0].mxu0
  %v131 = vadd.f32 0.0, %v130
  %v132 = vpop.f32.mrb[0].mxu0
  %v133 = vadd.f32 0.0, %v132
  %134 = vdwg.mxu0
  %v135 = vld [vmem:[%s1] sm:$0xff]
  %v136 = vld [vmem:[%s1 + $0x8] sm:$0xff]
  %v137 = vld [vmem:[%s1 + $0x10] sm:$0xff]
  %v138 = vld [vmem:[%s1 + $0x18] sm:$0xff]
  %v139 = vld [vmem:[%s1 + $0x20] sm:$0xff]
  %v140 = vld [vmem:[%s1 + $0x28] sm:$0xff]
  %v141 = vld [vmem:[%s1 + $0x30] sm:$0xff]
  %v142 = vld [vmem:[%s1 + $0x38] sm:$0xff]
  %v143 = vld [vmem:[%s1 + $0x40] sm:$0xff]
  %v144 = vld [vmem:[%s1 + $0x48] sm:$0xff]
  %v145 = vld [vmem:[%s1 + $0x50] sm:$0xff]
  %v146 = vld [vmem:[%s1 + $0x58] sm:$0xff]
  %v147 = vld [vmem:[%s1 + $0x60] sm:$0xff]
  %v148 = vld [vmem:[%s1 + $0x68] sm:$0xff]
  %v149 = vld [vmem:[%s1 + $0x70] sm:$0xff]
  %v150 = vld [vmem:[%s1 + $0x78] sm:$0xff]
  %v151 = vld [vmem:[%s1 + $0x80] sm:$0xff]
  %v152 = vld [vmem:[%s1 + $0x88] sm:$0xff]
  %v153 = vld [vmem:[%s1 + $0x90] sm:$0xff]
  %v154 = vld [vmem:[%s1 + $0x98] sm:$0xff]
  %v155 = vld [vmem:[%s1 + $0xa0] sm:$0xff]
  %v156 = vld [vmem:[%s1 + $0xa8] sm:$0xff]
  %v157 = vld [vmem:[%s1 + $0xb0] sm:$0xff]
  %v158 = vld [vmem:[%s1 + $0xb8] sm:$0xff]
  %v159 = vld [vmem:[%s1 + $0xc0] sm:$0xff]
  %v160 = vld [vmem:[%s1 + $0xc8] sm:$0xff]
  %v161 = vld [vmem:[%s1 + $0xd0] sm:$0xff]
  %v162 = vld [vmem:[%s1 + $0xd8] sm:$0xff]
  %v163 = vld [vmem:[%s1 + $0xe0] sm:$0xff]
  %v164 = vld [vmem:[%s1 + $0xe8] sm:$0xff]
  %v165 = vld [vmem:[%s1 + $0xf0] sm:$0xff]
  %v166 = vld [vmem:[%s1 + $0xf8] sm:$0xff]
  %v167 = vld [vmem:[%s1 + $0x100] sm:$0xff]
  %v168 = vld [vmem:[%s1 + $0x108] sm:$0xff]
  %v169 = vld [vmem:[%s1 + $0x110] sm:$0xff]
  %v170 = vld [vmem:[%s1 + $0x118] sm:$0xff]
  %v171 = vld [vmem:[%s1 + $0x120] sm:$0xff]
  %v172 = vld [vmem:[%s1 + $0x128] sm:$0xff]
  %v173 = vld [vmem:[%s1 + $0x130] sm:$0xff]
  %v174 = vld [vmem:[%s1 + $0x138] sm:$0xff]
  %v175 = vld [vmem:[%s1 + $0x140] sm:$0xff]
  %v176 = vld [vmem:[%s1 + $0x148] sm:$0xff]
  %v177 = vld [vmem:[%s1 + $0x150] sm:$0xff]
  %v178 = vld [vmem:[%s1 + $0x158] sm:$0xff]
  %v179 = vld [vmem:[%s1 + $0x160] sm:$0xff]
  %v180 = vld [vmem:[%s1 + $0x168] sm:$0xff]
  %v181 = vld [vmem:[%s1 + $0x170] sm:$0xff]
  %v182 = vld [vmem:[%s1 + $0x178] sm:$0xff]
  %v183 = vld [vmem:[%s1 + $0x180] sm:$0xff]
  %v184 = vld [vmem:[%s1 + $0x188] sm:$0xff]
  %v185 = vld [vmem:[%s1 + $0x190] sm:$0xff]
  %v186 = vld [vmem:[%s1 + $0x198] sm:$0xff]
  %v187 = vld [vmem:[%s1 + $0x1a0] sm:$0xff]
  %v188 = vld [vmem:[%s1 + $0x1a8] sm:$0xff]
  %v189 = vld [vmem:[%s1 + $0x1b0] sm:$0xff]
  %v190 = vld [vmem:[%s1 + $0x1b8] sm:$0xff]
  %v191 = vld [vmem:[%s1 + $0x1c0] sm:$0xff]
  %v192 = vld [vmem:[%s1 + $0x1c8] sm:$0xff]
  %v193 = vld [vmem:[%s1 + $0x1d0] sm:$0xff]
  %v194 = vld [vmem:[%s1 + $0x1d8] sm:$0xff]
  %v195 = vld [vmem:[%s1 + $0x1e0] sm:$0xff]
  %v196 = vld [vmem:[%s1 + $0x1e8] sm:$0xff]
  %v197 = vld [vmem:[%s1 + $0x1f0] sm:$0xff]
  %v198 = vld [vmem:[%s1 + $0x1f8] sm:$0xff]
  %v199 = vld [vmem:[%s2] sm:$0x3]
  %v201 = vlaneseq
  %v202 = vshrl.u32 %v201, 7
  %v203 = vsub.s32 0, %v202
  %v204 = vrot.slane %v199, %v203
  %v205 = vlaneseq
  %v206 = vshrl.u32 %v205, 7
  %v207 = vsub.s32 1, %v206
  %v208 = vrot.slane %v199, %v207
  %211 = vmatprep.subr.mxu0 %v136
  %212 = vmatpush1.msra.mxu0 %v135
  %213 = vmatprep.subr.mxu0 %v138
  %214 = vmatpush1.msra.mxu0 %v137
  %215 = vmatprep.subr.mxu0 %v140
  %216 = vmatpush1.msra.mxu0 %v139
  %217 = vmatprep.subr.mxu0 %v142
  %218 = vmatpush1.msra.mxu0 %v141
  %219 = vmatprep.subr.mxu0 %v144
  %220 = vmatpush1.msra.mxu0 %v143
  %221 = vmatprep.subr.mxu0 %v146
  %222 = vmatpush1.msra.mxu0 %v145
  %223 = vmatprep.subr.mxu0 %v148
  %224 = vmatpush1.msra.mxu0 %v147
  %225 = vmatprep.subr.mxu0 %v150
  %226 = vmatpush1.msra.mxu0 %v149
  %227 = vmatprep.subr.mxu0 %v152
  %228 = vmatpush1.msra.mxu0 %v151
  %229 = vmatprep.subr.mxu0 %v154
  %230 = vmatpush1.msra.mxu0 %v153
  %231 = vmatprep.subr.mxu0 %v156
  %232 = vmatpush1.msra.mxu0 %v155
  %233 = vmatprep.subr.mxu0 %v158
  %234 = vmatpush1.msra.mxu0 %v157
  %235 = vmatprep.subr.mxu0 %v160
  %236 = vmatpush1.msra.mxu0 %v159
  %237 = vmatprep.subr.mxu0 %v162
  %238 = vmatpush1.msra.mxu0 %v161
  %239 = vmatprep.subr.mxu0 %v164
  %240 = vmatpush1.msra.mxu0 %v163
  %241 = vmatprep.subr.mxu0 %v166
  %242 = vmatpush1.msra.mxu0 %v165
  %243 = vmatprep.subr.mxu0 %v168
  %244 = vmatpush1.msra.mxu0 %v167
  %245 = vmatprep.subr.mxu0 %v170
  %246 = vmatpush1.msra.mxu0 %v169
  %247 = vmatprep.subr.mxu0 %v172
  %248 = vmatpush1.msra.mxu0 %v171
  %249 = vmatprep.subr.mxu0 %v174
  %250 = vmatpush1.msra.mxu0 %v173
  %251 = vmatprep.subr.mxu0 %v176
  %252 = vmatpush1.msra.mxu0 %v175
  %253 = vmatprep.subr.mxu0 %v178
  %254 = vmatpush1.msra.mxu0 %v177
  %255 = vmatprep.subr.mxu0 %v180
  %256 = vmatpush1.msra.mxu0 %v179
  %257 = vmatprep.subr.mxu0 %v182
  %258 = vmatpush1.msra.mxu0 %v181
  %259 = vmatprep.subr.mxu0 %v184
  %260 = vmatpush1.msra.mxu0 %v183
  %261 = vmatprep.subr.mxu0 %v186
  %262 = vmatpush1.msra.mxu0 %v185
  %263 = vmatprep.subr.mxu0 %v188
  %264 = vmatpush1.msra.mxu0 %v187
  %265 = vmatprep.subr.mxu0 %v190
  %266 = vmatpush1.msra.mxu0 %v189
  %267 = vmatprep.subr.mxu0 %v192
  %268 = vmatpush1.msra.mxu0 %v191
  %269 = vmatprep.subr.mxu0 %v194
  %270 = vmatpush1.msra.mxu0 %v193
  %271 = vmatprep.subr.mxu0 %v196
  %272 = vmatpush1.msra.mxu0 %v195
  %273 = vmatprep.subr.mxu0 %v198
  %274 = vmatpush1.msra.mxu0 %v197
  %275 = vmatprep.mubr.f32.mxu0 %v133
  %276 = vmatmul.mubr.f32.gmra.mrb[0].mxu0 %v131
  %v277 = vpop.f32.mrb[0].mxu0
  %v278 = vadd.f32 %v204, %v277
  %v279 = vpop.f32.mrb[0].mxu0
  %v280 = vadd.f32 %v208, %v279
  %281 = vdwg.mxu0
  %v282 = vmax.f32 %v278, 0.0
  %v283 = vmax.f32 %v280, 0.0
  %v284 = vld [vmem:[%s3] sm:$0x3]
  %v286 = vlaneseq
  %v287 = vshrl.u32 %v286, 7
  %v288 = vsub.s32 0, %v287
  %v289 = vrot.slane %v284, %v288
  %v290 = vlaneseq
  %v291 = vshrl.u32 %v290, 7
  %v292 = vsub.s32 1, %v291
  %v293 = vrot.slane %v284, %v292
  %v296 = vmul.f32 %v282, %v289
  %v297 = vmul.f32 %v283, %v293
  %vm298 = vcmask 1041408
  %v299 = vsel %vm298, %v296, 0.0
  %v300 = vsel %vm298, %v297, 0.0
  %v301 = vadd.f32 %v299, %v300
  %302 = vadd.xlane.f32.xlu0 %v301
  %v303 = vpop.xlane.xlu0 %302
  %v304 = vld [vmem:[#allocation2] sm:$0x1]
  %v306 = vlaneseq
  %v307 = vshrl.u32 %v306, 7
  %v308 = vsub.s32 0, %v307
  %v309 = vrot.slane %v304, %v308
  %v311 = vadd.f32 %v303, %v309
  %vm312 = vcmask 1024
  %313 = vst.msk [vmem:[%s5] sm:$0x3] %vm312, %v311
  // Predicated region
  $region22: #{scblock_forward.1} parent=0 // pred_check
    _
  $region23: #{scblock_forward.1} parent=0 // pred_check_branch
    %315 = sbr.rel (0) target = $region25
  $region24: #{scblock_forward.1} parent=0 // pred_region
    _
  $region25: #{scblock_forward.1} parent=0 // pred_fallthru
    _
  // Predicated region
  $region26: #{scblock_forward.1} parent=0 // pred_check
    _
  $region27: #{scblock_forward.1} parent=0 // pred_check_branch
    %317 = sbr.rel (0) target = $region29
  $region28: #{scblock_forward.1} parent=0 // pred_region
    _
  $region29: #{scblock_forward.1} parent=0 // pred_fallthru
    _

</llo_original>
